<compile_context>
chip_gen: v7x
topology: tpu7x:2x2x1
jax: 0.10.0
libtpu: 0.0.40
codegen_flags: <defaults>
</compile_context>

<pallas_src>
import jax
import jax.numpy as jnp
from jax import lax
from jax.experimental import pallas as pl
from jax.experimental.pallas import tpu as pltpu


def _round_up(a, b):
    return -(-a // b) * b


def _layout_bytes(shape, itemsize):
    """VMEM bytes of a block, rounded to TPU tiling (sublane x 128 lanes)."""
    sublane = {4: 8, 2: 16, 1: 32}.get(itemsize, 8)
    lead = 1
    for d in shape[:-2]:
        lead *= int(d)
    s2 = _round_up(int(shape[-2]), sublane) if len(shape) >= 2 else 1
    s1 = _round_up(int(shape[-1]), 128)
    return lead * s2 * s1 * itemsize


def _vmem_capacity_bytes():
    try:
        return int(pltpu.get_tpu_info().vmem_capacity_bytes)
    except Exception:
        return 64 << 20  # v7x-conservative fallback


def _const_spec(shape):
    """Resident block: constant index_map, single VMEM buffer."""
    idx = lambda nb, sb: (0, 0)
    try:
        return pl.BlockSpec(shape, idx, pipeline_mode=pl.Buffered(1))
    except TypeError:  # older signatures without pipeline_mode
        return pl.BlockSpec(shape, idx)


def _linear_kernel(w_ref, b_ref, x_ref, o_ref):
    # w_ref: (Cout, Cin)     resident, io dtype
    # b_ref: (Cout, 1)       resident, f32
    # x_ref: (TB, Cin, TS)   io dtype
    # o_ref: (TB, Cout, TS)  io dtype
    w = w_ref[...]
    tb, cout, ts = o_ref.shape
    # Hoist the bias broadcast out of the batch loop (JAX does not CSE it).
    bias_b = jnp.broadcast_to(b_ref[...], (cout, ts))

    def body(i, carry):
        acc = jnp.dot(w, x_ref[i], preferred_element_type=jnp.float32)
        o_ref[i] = (acc + bias_b).astype(o_ref.dtype)
        return carry

    if tb <= 4:
        for i in range(tb):
            body(i, None)
    else:
        lax.fori_loop(0, tb, body, None, unroll=True)


def linear_1x1(x, weight, bias, *, tb=None, ts=None, io_dtype=None):
    """Pallas equivalent of `linear.forward` (1x1 Conv2d with bias).

    x:        (N, Cin, V, L)
    weight:   (Cout, Cin) or (Cout, Cin, 1, 1)
    bias:     (Cout,)
    io_dtype: HBM-side dtype for x / W / output (default: x.dtype).
              Accumulation + bias add are always f32.
    returns   (N, Cout, V, L) in io_dtype.
    """
    if weight.ndim == 4:
        weight = weight.reshape(weight.shape[0], weight.shape[1])
    N, Cin, V, L = x.shape
    Cout, Cin2 = weight.shape
    assert Cin == Cin2, f"weight in-dim {Cin2} must match x channel dim {Cin}"

    S = V * L
    io_dtype = jnp.dtype(x.dtype if io_dtype is None else io_dtype)
    io_isz = io_dtype.itemsize

    # ---- generation-aware, layout-rounded VMEM budget ----
    phys = _vmem_capacity_bytes()
    resident = _layout_bytes((Cout, Cin), io_isz) + _layout_bytes((Cout, 1), 4)
    min_blk = 2 * (_layout_bytes((1, Cin, min(S, 128)), io_isz)
                   + _layout_bytes((1, Cout, min(S, 128)), io_isz))
    # ~55% of physical VMEM (minus resident W/b) for double-buffered x/out blocks.
    budget = max(int(0.55 * phys) - resident, min_blk)

    def _blocks_bytes(tb_, ts_):
        return 2 * (_layout_bytes((tb_, Cin, ts_), io_isz)
                    + _layout_bytes((tb_, Cout, ts_), io_isz))

    def _fits(tb_, ts_):
        return _blocks_bytes(tb_, ts_) <= budget

    user_ts = ts is not None
    user_tb = tb is not None

    # ---- lane (spatial) tile: grow this first (mem-bound kernel) ----
    if ts is None:
        if _fits(1, S):
            ts = S  # one full-extent spatial block per sample-tile
        else:
            ts = 128
            cand = 256
            while cand <= S and _fits(1, cand):
                ts = cand  # multiple of 128; ragged tail handled by masking
                cand *= 2
    else:
        assert ts == S or ts % 128 == 0, \
            "ts must equal the full spatial extent or be a multiple of 128"

    # ---- batch tile second ----
    if tb is None:
        tb = 1
        for cand in (2, 4, 8, 16, 32):
            if N % cand == 0 and _fits(cand, ts):
                tb = cand
    else:
        assert N % tb == 0, "tb must divide N"

    if user_tb or user_ts:
        assert _blocks_bytes(tb, ts) <= budget, (
            f"(tb={tb}, ts={ts}) needs {_blocks_bytes(tb, ts)} B of "
            f"double-buffered VMEM; budget is {budget} B")

    # ---- megacore: make sure the parallel grid has >= 2 steps (v7x: 2 TCs) ----
    def _n_steps(tb_, ts_):
        return (N // tb_) * -(-S // ts_)

    if not (user_tb or user_ts):
        while _n_steps(tb, ts) < 2:
            if tb > 1:
                tb = next(d for d in range(tb - 1, 0, -1) if N % d == 0)
            elif ts > 128:
                ts = _round_up(max(ts // 2, 1), 128)
            else:
                break  # N == 1 and S <= 128: nothing left to split

    grid = (N // tb, -(-S // ts))

    # ---- HBM-side arrays: no padding round-trips ----
    x_flat = x.reshape(N, Cin, S).astype(io_dtype)
    w2 = weight.astype(io_dtype)
    b2 = bias.reshape(Cout, 1).astype(jnp.float32)  # bias / accumulation in f32

    needed = resident + _blocks_bytes(tb, ts) + (4 << 20)
    cap = int(phys * 0.82)  # ~52 MiB on v7x (64 MiB phys), ~105 MiB on v5e/v6e
    vmem_limit = max(needed, 32 << 20)
    vmem_limit = min(vmem_limit, max(cap, needed + (1 << 20)))
    vmem_limit = int(min(vmem_limit, phys - (2 << 20)))

    flops = 2 * N * Cout * Cin * S
    bytes_accessed = int(io_isz * (N * Cin * S + N * Cout * S + Cout * Cin)
                         + 4 * Cout)

    out_flat = pl.pallas_call(
        _linear_kernel,
        out_shape=jax.ShapeDtypeStruct((N, Cout, S), io_dtype),
        grid_spec=pltpu.PrefetchScalarGridSpec(
            num_scalar_prefetch=0,
            grid=grid,
            in_specs=[
                _const_spec((Cout, Cin)),            # weight: resident
                _const_spec((Cout, 1)),              # bias:   resident, f32
                pl.BlockSpec((tb, Cin, ts), lambda nb, sb: (nb, 0, sb)),
            ],
            out_specs=pl.BlockSpec((tb, Cout, ts), lambda nb, sb: (nb, 0, sb)),
        ),
        compiler_params=pltpu.CompilerParams(
            dimension_semantics=("parallel", "parallel"),
            vmem_limit_bytes=vmem_limit,
        ),
        cost_estimate=pl.CostEstimate(
            flops=flops, transcendentals=0, bytes_accessed=bytes_accessed),
    )(w2, b2, x_flat)

    return out_flat.reshape(N, Cout, V, L)


if __name__ == "__main__":
    key = jax.random.PRNGKey(0)
    kx, kw, kb = jax.random.split(key, 3)

    # Small shapes consistent with the module: batch=2, c_in=4, spatial=16,
    # seq=8, hidden (c_out)=32.
    N, Cin, V, L = 2, 4, 16, 8
    Cout = 32

    x = jax.random.normal(kx, (N, Cin, V, L), dtype=jnp.float32)
    weight = jax.random.normal(kw, (Cout, Cin), dtype=jnp.float32) * 0.1
    bias = jax.random.normal(kb, (Cout,), dtype=jnp.float32)

    # Reference mirroring the PyTorch 1x1 conv with bias.
    ref = jnp.einsum("ncvl,oc->novl", x, weight) + bias[None, :, None, None]

    # Exact f32 I/O path (matches PyTorch numerics).
    out = jax.block_until_ready(linear_1x1(x, weight, bias))
    assert out.shape == (N, Cout, V, L)
    assert jnp.allclose(out, ref, atol=1e-5, rtol=1e-5), "f32 mismatch vs reference"

    # bf16 HBM-I/O path (f32 accumulation) — halves HBM traffic on this
    # memory-bound op; looser tolerance for the bf16 I/O rounding.
    out_bf16 = jax.block_until_ready(
        linear_1x1(x, weight, bias, io_dtype=jnp.bfloat16))
    assert out_bf16.dtype == jnp.bfloat16
    assert jnp.allclose(out_bf16.astype(jnp.float32), ref, atol=5e-2, rtol=5e-2), \
        "bf16 mismatch vs reference"

    print("KERNEL_OK")
</pallas_src>

<mosaic_0001>
module attributes {stable_mosaic.version = 11 : i64} {
  func.func @_linear_kernel(%arg0: i32, %arg1: i32, %arg2: memref<32x4xf32, #tpu.memory_space<vmem>>, %arg3: memref<32x1xf32, #tpu.memory_space<vmem>>, %arg4: memref<1x4x128xf32, #tpu.memory_space<vmem>>, %arg5: memref<1x32x128xf32, #tpu.memory_space<vmem>>) attributes {dimension_semantics = [#tpu.dimension_semantics<parallel>, #tpu.dimension_semantics<parallel>], iteration_bounds = array<i64: 2, 1>, scalar_prefetch = 0 : i64, scratch_operands = 0 : i64, tpu.core_type = #tpu.core_type<tc>, window_params = [{pipeline_mode = #tpu.pipeline_mode<synchronous>, transform_indices = @transform_0, window_bounds = array<i64: 32, 4>}, {pipeline_mode = #tpu.pipeline_mode<synchronous>, transform_indices = @transform_1, window_bounds = array<i64: 32, 1>}, {transform_indices = @transform_2, window_bounds = array<i64: 1, 4, 128>}, {transform_indices = @transform_3, window_bounds = array<i64: 1, 32, 128>}]} {
    %c0 = arith.constant 0 : index
    %c0_0 = arith.constant 0 : index
    %0 = vector.load %arg2[%c0, %c0_0] : memref<32x4xf32, #tpu.memory_space<vmem>>, vector<32x4xf32>
    %c0_1 = arith.constant 0 : index
    %c0_2 = arith.constant 0 : index
    %1 = vector.load %arg3[%c0_1, %c0_2] : memref<32x1xf32, #tpu.memory_space<vmem>>, vector<32x1xf32>
    %2 = vector.shape_cast %1 : vector<32x1xf32> to vector<32x1xf32>
    %3 = vector.broadcast %2 : vector<32x1xf32> to vector<32x128xf32>
    %c0_3 = arith.constant 0 : index
    %c0_4 = arith.constant 0 : index
    %c0_5 = arith.constant 0 : index
    %4 = vector.load %arg4[%c0_3, %c0_4, %c0_5] : memref<1x4x128xf32, #tpu.memory_space<vmem>>, vector<1x4x128xf32>
    %5 = vector.shape_cast %4 : vector<1x4x128xf32> to vector<4x128xf32>
    %cst = arith.constant dense<0.000000e+00> : vector<32x128xf32>
    %6 = tpu.matmul %0, %5, %cst {dimension_numbers = #tpu.dot_dimension_numbers<[1], [0], [0], [1], [0, 0, 1, 1], [], []>} : vector<32x4xf32>, vector<4x128xf32>, vector<32x128xf32> -> vector<32x128xf32>
    %7 = arith.addf %6, %3 : vector<32x128xf32>
    %c0_6 = arith.constant 0 : index
    %c0_7 = arith.constant 0 : index
    %c0_8 = arith.constant 0 : index
    %8 = vector.load %arg5[%c0_6, %c0_7, %c0_8] : memref<1x32x128xf32, #tpu.memory_space<vmem>>, vector<1x32x128xf32>
    %9 = vector.shape_cast %8 : vector<1x32x128xf32> to vector<32x128xf32>
    %10 = vector.shape_cast %7 : vector<32x128xf32> to vector<1x32x128xf32>
    tpu.vector_store %arg5[%c0_6, %c0_7, %c0_8], %10 {strides = array<i32>} : memref<1x32x128xf32, #tpu.memory_space<vmem>>, vector<1x32x128xf32>,
    return
  }
  func.func @transform_0(%arg0: i32, %arg1: i32) -> (i32, i32) {
    %c0_i32 = arith.constant 0 : i32
    %c0_i32_0 = arith.constant 0 : i32
    %c0_i32_1 = arith.constant 0 : i32
    return %c0_i32, %c0_i32_0 : i32, i32
  }
  func.func @transform_1(%arg0: i32, %arg1: i32) -> (i32, i32) {
    %c0_i32 = arith.constant 0 : i32
    %c0_i32_0 = arith.constant 0 : i32
    %c0_i32_1 = arith.constant 0 : i32
    return %c0_i32, %c0_i32_0 : i32, i32
  }
  func.func @transform_2(%arg0: i32, %arg1: i32) -> (i32, i32, i32) {
    %c0_i32 = arith.constant 0 : i32
    %c0_i32_0 = arith.constant 0 : i32
    return %arg0, %c0_i32, %arg1 : i32, i32, i32
  }
  func.func @transform_3(%arg0: i32, %arg1: i32) -> (i32, i32, i32) {
    %c0_i32 = arith.constant 0 : i32
    %c0_i32_0 = arith.constant 0 : i32
    return %arg0, %c0_i32, %arg1 : i32, i32, i32
  }
}

</mosaic_0001>

<llo_original>
// kernel: tpu_custom_call.1
$region0: #{tpu_custom_call.1}
  #allocation0 [shape = 'u32[]', space=smem, size = 0x4, offset = 0x4, fixed_abs, tag = 'smem constant byte address 0x4 - core index']
  #allocation1 [shape = 'u32[144,128]{1,0:T(1,128)}', space=vmem, size = 0x12000, scoped, tag = 'internal scratch']
  %s0 = inlined_call_operand.vmem [shape: f32[32,4], index: 0, kind: input, shape index: {}]
  %s1 = inlined_call_operand.vmem [shape: f32[32,1], index: 1, kind: input, shape index: {}]
  %s2 = inlined_call_operand.vmem [shape: f32[2,4,128], index: 2, kind: input, shape index: {}]
  %s3 = inlined_call_operand.hbm [shape: f32[2,32,128], index: 3, kind: output, shape index: {}]
  %s4 = sld [smem:[#allocation0]]
  $region45: #{tpu_custom_call.1} parent=0
    _
  %s6 = ssub.s32 1, %s4
  %s7 = scalar_select 0, %s6, %s4
  $region1: #{tpu_custom_call.1} parent=0
    #allocation2 [shape = 'u8[32768]{0}', space=vmem, size = 0x8000, scoped, tag = 'output window, operand 0']
    #allocation3 [shape = 's32[2]{0}', space=sflag, size = 0x8, scoped, tag = 'scoped memory for tpu_custom_call.1']
    %8 = vsyncpa [#allocation3], 0
    %s9 = scalar_lea.sflag [#allocation3], 1
    %10 = vsyncpa %s9, 0
    loop: start=0, step=1, limit=4
    $region2: #{tpu_custom_call.1} parent=1 // loop_pre_header
      _
    $region3: #{tpu_custom_call.1} parent=1 // loop_header
      %s12 = sphi 0, %s16
      %p13 = scmp.ge.s32.totalorder %s12, 4
      %s19 = sphi 0, %s31
      %s20 = sphi 0, %s27
      %s21 = sphi 0, %s19
      %s22 = sphi 0, %s20
      %s23 = sphi 0, %s21
      %s24 = sphi 0, %s22
      %s32 = sphi 0, %s32
      %s34 = sphi 0, %s32
      %s35 = sphi 0, %s34
      %s49 = sphi 0, %s35
      %s53 = sphi 0, %s53
      %s55 = sphi 0, %s53
      %s56 = sphi 0, %s55
      %s70 = sphi 0, %s56
      %s78 = sphi 0, %s80
      %s81 = sphi 0, %s78
      %s82 = sphi 0, %s81
      %s98 = sphi 0, %s82
      %s106 = sphi 0, %s108
      %s109 = sphi 0, %s106
      %s110 = sphi 0, %s109
      %s126 = sphi 0, %s110
    $region4: #{tpu_custom_call.1} parent=1 // loop_header_branch
      %15 = sbr.rel (%p13) target = $region8
    $region5: #{tpu_custom_call.1} parent=1 // loop_body
      %s17 = ssub.s32 %s12, 1
      %s18 = ssub.s32 %s12, 2
      %s25 = sadd.s32 1, %s20
      %p26 = scmp.ge.s32.totalorder %s25, 1
      %s27 = scalar_select %p26, 0, %s25
      %s28 = sadd.s32 1, %s19
      %s29 = scalar_select %p26, %s28, %s19
      %p30 = scmp.ge.s32.totalorder %s29, 2
      %s31 = scalar_select %p30, 0, %s29
      %s33 = sadd.s32 %s32, 1
      %p36 = scmp.eq.s32.totalorder %s12, 1
      %p37 = scmp.ne.s32.totalorder %s32, %s34
      %p38 = scmp.eq.s32.totalorder %s12, 0
      %p39 = por %p37, %p38
      %p40 = scmp.ne.s32.totalorder %s32, %s34
      %p41 = scmp.eq.s32.totalorder %s17, 1
      %p42 = por %p40, %p41
      %p43 = scmp.ne.s32.totalorder %s34, %s35
      %p44 = scmp.eq.s32.totalorder %s17, 0
      %p45 = por %p43, %p44
      %p46 = scmp.ne.s32.totalorder %s34, %s35
      %p47 = scmp.eq.s32.totalorder %s18, 1
      %p48 = por %p46, %p47
      %p50 = scmp.ne.s32.totalorder %s35, %s49
      %p51 = scmp.eq.s32.totalorder %s18, 0
      %p52 = por %p50, %p51
      %s54 = sadd.s32 %s53, 1
      %p57 = scmp.eq.s32.totalorder %s12, 1
      %p58 = scmp.ne.s32.totalorder %s53, %s55
      %p59 = scmp.eq.s32.totalorder %s12, 0
      %p60 = por %p58, %p59
      %p61 = scmp.ne.s32.totalorder %s53, %s55
      %p62 = scmp.eq.s32.totalorder %s17, 1
      %p63 = por %p61, %p62
      %p64 = scmp.ne.s32.totalorder %s55, %s56
      %p65 = scmp.eq.s32.totalorder %s17, 0
      %p66 = por %p64, %p65
      %p67 = scmp.ne.s32.totalorder %s55, %s56
      %p68 = scmp.eq.s32.totalorder %s18, 1
      %p69 = por %p67, %p68
      %p71 = scmp.ne.s32.totalorder %s56, %s70
      %p72 = scmp.eq.s32.totalorder %s18, 0
      %p73 = por %p71, %p72
      %s74 = ssub.s32 %s19, %s31
      %s75 = ssub.s32 %s20, %s27
      %s76 = sor.u32 %s74, %s75
      %p77 = scmp.eq.s32.totalorder %s76, 0
      %s79 = sadd.s32 %s78, 1
      %s80 = scalar_select %p77, %s78, %s79
      %p83 = pneg %p77
      %p84 = scmp.eq.s32.totalorder %s12, 1
      %p85 = por %p83, %p84
      %p86 = scmp.ne.s32.totalorder %s78, %s81
      %p87 = scmp.eq.s32.totalorder %s12, 0
      %p88 = por %p86, %p87
      %p89 = scmp.ne.s32.totalorder %s78, %s81
      %p90 = scmp.eq.s32.totalorder %s17, 1
      %p91 = por %p89, %p90
      %p92 = scmp.ne.s32.totalorder %s81, %s82
      %p93 = scmp.eq.s32.totalorder %s17, 0
      %p94 = por %p92, %p93
      %p95 = scmp.ne.s32.totalorder %s81, %s82
      %p96 = scmp.eq.s32.totalorder %s18, 1
      %p97 = por %p95, %p96
      %p99 = scmp.ne.s32.totalorder %s82, %s98
      %p100 = scmp.eq.s32.totalorder %s18, 0
      %p101 = por %p99, %p100
      %s102 = ssub.s32 %s19, %s31
      %s103 = ssub.s32 %s20, %s27
      %s104 = sor.u32 %s102, %s103
      %p105 = scmp.eq.s32.totalorder %s104, 0
      %s107 = sadd.s32 %s106, 1
      %s108 = scalar_select %p105, %s106, %s107
      %p111 = pneg %p105
      %p112 = scmp.eq.s32.totalorder %s12, 1
      %p113 = por %p111, %p112
      %p114 = scmp.ne.s32.totalorder %s106, %s109
      %p115 = scmp.eq.s32.totalorder %s12, 0
      %p116 = por %p114, %p115
      %p117 = scmp.ne.s32.totalorder %s106, %s109
      %p118 = scmp.eq.s32.totalorder %s17, 1
      %p119 = por %p117, %p118
      %p120 = scmp.ne.s32.totalorder %s109, %s110
      %p121 = scmp.eq.s32.totalorder %s17, 0
      %p122 = por %p120, %p121
      %p123 = scmp.ne.s32.totalorder %s109, %s110
      %p124 = scmp.eq.s32.totalorder %s18, 1
      %p125 = por %p123, %p124
      %p127 = scmp.ne.s32.totalorder %s110, %s126
      %p128 = scmp.eq.s32.totalorder %s18, 0
      %p129 = por %p127, %p128
      %p130 = scmp.le.s32.totalorder 1, %s12
      %p131 = scmp.lt.s32.totalorder %s12, 3
      %p132 = pnand %p130, %p131
      %p133 = pneg %p132
      // Predicated region
      $region9: #{tpu_custom_call.1} parent=5 // pred_check
        _
      $region10: #{tpu_custom_call.1} parent=5 // pred_check_branch
        %135 = sbr.rel (%p132) target = $region12
      $region11: #{tpu_custom_call.1} parent=5 // pred_region
        %s136 = ssub.s32 %s12, 1
        // Predicated region
        $region13: #{tpu_custom_call.1} parent=11 // pred_check
          %p137 = pneg %p45
        $region14: #{tpu_custom_call.1} parent=11 // pred_check_branch
          %139 = sbr.rel (%p137) target = $region16
        $region15: #{tpu_custom_call.1} parent=11 // pred_region
          _
        $region16: #{tpu_custom_call.1} parent=11 // pred_fallthru
          _
        // Predicated region
        $region17: #{tpu_custom_call.1} parent=11 // pred_check
          %p140 = pneg %p66
        $region18: #{tpu_custom_call.1} parent=11 // pred_check_branch
          %142 = sbr.rel (%p140) target = $region20
        $region19: #{tpu_custom_call.1} parent=11 // pred_region
          _
        $region20: #{tpu_custom_call.1} parent=11 // pred_fallthru
          _
      $region12: #{tpu_custom_call.1} parent=5 // pred_fallthru
        _
      %p143 = scmp.lt.s32.totalorder %s12, 2
      // Predicated region
      $region21: #{tpu_custom_call.1} parent=5 // pred_check
        %p144 = pneg %p143
      $region22: #{tpu_custom_call.1} parent=5 // pred_check_branch
        %146 = sbr.rel (%p144) target = $region24
      $region23: #{tpu_custom_call.1} parent=5 // pred_region
        // Predicated region
        $region25: #{tpu_custom_call.1} parent=23 // pred_check
          %p147 = pneg %p88
        $region26: #{tpu_custom_call.1} parent=23 // pred_check_branch
          %149 = sbr.rel (%p147) target = $region28
        $region27: #{tpu_custom_call.1} parent=23 // pred_region
          %p150 = scmp.lt.s32.totalorder %s19, 1
          %s151 = scalar_select %p150, %s19, 1
          %p152 = scmp.lt.s32.totalorder %s20, 0
          %s153 = scalar_select %p152, %s20, 0
          %s154 = sadd.s32 %s153, %s151
          %s155 = smul.addr %s154, 4
          %s156 = scalar_lea.vmem %s2, %s155
        $region28: #{tpu_custom_call.1} parent=23 // pred_fallthru
          _
      $region24: #{tpu_custom_call.1} parent=5 // pred_fallthru
        _
      %p157 = scmp.le.s32.totalorder 1, %s12
      %p158 = scmp.lt.s32.totalorder %s12, 3
      %p159 = pnand %p157, %p158
      %p160 = pneg %p159
      // Predicated region
      $region29: #{tpu_custom_call.1} parent=5 // pred_check
        _
      $region30: #{tpu_custom_call.1} parent=5 // pred_check_branch
        %162 = sbr.rel (%p159) target = $region32
      $region31: #{tpu_custom_call.1} parent=5 // pred_region
        %s163 = ssub.s32 %s12, 1
        %p164 = pneg %p45
        %p165 = pneg %p42
        %p166 = pneg %p66
        %p167 = pneg %p63
        %p168 = scmp.lt.s32.totalorder %s21, 1
        %s169 = scalar_select %p168, %s21, 1
        %p170 = scmp.lt.s32.totalorder %s22, 0
        %s171 = scalar_select %p170, %s22, 0
        %s172 = sadd.s32 %s171, %s169
        %s173 = smul.addr %s172, 4
        %s174 = scalar_lea.vmem %s2, %s173
        %p175 = pneg %p94
        %p176 = pneg %p91
        %p177 = pneg %p122
        %p178 = pneg %p119
        %s179 = sand.u32 %s109, 1
        %s180 = scalar_lea.sflag [#allocation3], %s179
        %s181 = sand.u32 %s109, 1
        %s182 = smul.addr %s181, 32
        %s183 = scalar_lea.vmem [#allocation2], %s182
        %p184 = scmp.lt.s32.totalorder %s21, 1
        %s185 = scalar_select %p184, %s21, 1
        %p186 = scmp.lt.s32.totalorder %s22, 0
        %s187 = scalar_select %p186, %s22, 0
        %s188 = sadd.s32 %s187, %s185
        %s189 = smul.addr %s188, 4
        %s190 = scalar_lea.vmem %s2, %s189
        %v191 = vld [vmem:[%s0] sm:$0xff]
        %v192 = vld [vmem:[%s0 + $0x8] sm:$0xff]
        %v193 = vld [vmem:[%s0 + $0x10] sm:$0xff]
        %v194 = vld [vmem:[%s0 + $0x18] sm:$0xff]
        %v195 = vld [vmem:[%s1] sm:$0xff]
        %v196 = vld [vmem:[%s1 + $0x8] sm:$0xff]
        %v197 = vld [vmem:[%s1 + $0x10] sm:$0xff]
        %v198 = vld [vmem:[%s1 + $0x18] sm:$0xff]
        %200 = vset.pattern.permute.xlu0 0
        %201 = vperm.xlu0 %200, %v195
        %v202 = vpop.permute.xlu0 %201
        %205 = vset.pattern.permute.xlu0 0
        %206 = vperm.xlu0 %205, %v196
        %v207 = vpop.permute.xlu0 %206
        %210 = vset.pattern.permute.xlu0 0
        %211 = vperm.xlu0 %210, %v197
        %v212 = vpop.permute.xlu0 %211
        %215 = vset.pattern.permute.xlu0 0
        %216 = vperm.xlu0 %215, %v198
        %v217 = vpop.permute.xlu0 %216
        %v219 = vld [vmem:[%s190] sm:$0xf]
        %vm220 = vcmask 31744
        %v222 = vsel %vm220, %v191, 0
        %v225 = vsel %vm220, %v192, 0
        %v228 = vsel %vm220, %v193, 0
        %v231 = vsel %vm220, %v194, 0
        %vm233 = vcmask 1043456
        %v235 = vsel %vm233, %v219, 0
        %237 = vmatprep.subr.mxu0 0.0
        %238 = vmatpush1.msra.mxu0 %v235
        %239 = vmatprep.subr.mxu0 0.0
        %240 = vmatpush1.msra.mxu0 0.0
        %241 = vmatprep.subr.mxu0 0.0
        %242 = vmatpush1.msra.mxu0 0.0
        %243 = vmatprep.subr.mxu0 0.0
        %244 = vmatpush1.msra.mxu0 0.0
        %245 = vmatprep.subr.mxu0 0.0
        %246 = vmatpush1.msra.mxu0 0.0
        %247 = vmatprep.subr.mxu0 0.0
        %248 = vmatpush1.msra.mxu0 0.0
        %249 = vmatprep.subr.mxu0 0.0
        %250 = vmatpush1.msra.mxu0 0.0
        %251 = vmatprep.subr.mxu0 0.0
        %252 = vmatpush1.msra.mxu0 0.0
        %253 = vmatprep.subr.mxu0 0.0
        %254 = vmatpush1.msra.mxu0 0.0
        %255 = vmatprep.subr.mxu0 0.0
        %256 = vmatpush1.msra.mxu0 0.0
        %257 = vmatprep.subr.mxu0 0.0
        %258 = vmatpush1.msra.mxu0 0.0
        %259 = vmatprep.subr.mxu0 0.0
        %260 = vmatpush1.msra.mxu0 0.0
        %261 = vmatprep.subr.mxu0 0.0
        %262 = vmatpush1.msra.mxu0 0.0
        %263 = vmatprep.subr.mxu0 0.0
        %264 = vmatpush1.msra.mxu0 0.0
        %265 = vmatprep.subr.mxu0 0.0
        %266 = vmatpush1.msra.mxu0 0.0
        %267 = vmatprep.subr.mxu0 0.0
        %268 = vmatpush1.msra.mxu0 0.0
        %269 = vmatprep.subr.mxu0 0.0
        %270 = vmatpush1.msra.mxu0 0.0
        %271 = vmatprep.subr.mxu0 0.0
        %272 = vmatpush1.msra.mxu0 0.0
        %273 = vmatprep.subr.mxu0 0.0
        %274 = vmatpush1.msra.mxu0 0.0
        %275 = vmatprep.subr.mxu0 0.0
        %276 = vmatpush1.msra.mxu0 0.0
        %277 = vmatprep.subr.mxu0 0.0
        %278 = vmatpush1.msra.mxu0 0.0
        %279 = vmatprep.subr.mxu0 0.0
        %280 = vmatpush1.msra.mxu0 0.0
        %281 = vmatprep.subr.mxu0 0.0
        %282 = vmatpush1.msra.mxu0 0.0
        %283 = vmatprep.subr.mxu0 0.0
        %284 = vmatpush1.msra.mxu0 0.0
        %285 = vmatprep.subr.mxu0 0.0
        %286 = vmatpush1.msra.mxu0 0.0
        %287 = vmatprep.subr.mxu0 0.0
        %288 = vmatpush1.msra.mxu0 0.0
        %289 = vmatprep.subr.mxu0 0.0
        %290 = vmatpush1.msra.mxu0 0.0
        %291 = vmatprep.subr.mxu0 0.0
        %292 = vmatpush1.msra.mxu0 0.0
        %293 = vmatprep.subr.mxu0 0.0
        %294 = vmatpush1.msra.mxu0 0.0
        %295 = vmatprep.subr.mxu0 0.0
        %296 = vmatpush1.msra.mxu0 0.0
        %297 = vmatprep.subr.mxu0 0.0
        %298 = vmatpush1.msra.mxu0 0.0
        %299 = vmatprep.subr.mxu0 0.0
        %300 = vmatpush1.msra.mxu0 0.0
        %301 = vmatprep.mubr.f32.mxu0 0.0
        %302 = vmatmul.mubr.f32.gmra.mrb[0].mxu0 %v222
        %v303 = vpop.f32.mrb[0].mxu0
        %v304 = vadd.f32 %v202, %v303
        %v305 = vpop.f32.mrb[0].mxu0
        %306 = vmatprep.mubr.f32.mxu0 0.0
        %307 = vmatmul.mubr.f32.gmra.mrb[0].mxu0 %v225
        %v308 = vpop.f32.mrb[0].mxu0
        %v309 = vadd.f32 %v207, %v308
        %v310 = vpop.f32.mrb[0].mxu0
        %311 = vmatprep.mubr.f32.mxu0 0.0
        %312 = vmatmul.mubr.f32.gmra.mrb[0].mxu0 %v228
        %v313 = vpop.f32.mrb[0].mxu0
        %v314 = vadd.f32 %v212, %v313
        %v315 = vpop.f32.mrb[0].mxu0
        %316 = vmatprep.mubr.f32.mxu0 0.0
        %317 = vmatmul.mubr.f32.gmra.mrb[0].mxu0 %v231
        %v318 = vpop.f32.mrb[0].mxu0
        %v319 = vadd.f32 %v217, %v318
        %v320 = vpop.f32.mrb[0].mxu0
        %321 = vdwg.mxu0
        %322 = vst [vmem:[%s183] sm:$0xff] %v304
        %323 = vst [vmem:[%s183 + $0x8] sm:$0xff] %v309
        %324 = vst [vmem:[%s183 + $0x10] sm:$0xff] %v314
        %325 = vst [vmem:[%s183 + $0x18] sm:$0xff] %v319
        %s326 = sand.u32 %s109, 1
        %s327 = scalar_lea.sflag [#allocation3], %s326
        %s328 = sand.u32 %s109, 1
        %s329 = smul.addr %s328, 32
        %s330 = scalar_lea.vmem [#allocation2], %s329
        // Predicated region
        $region33: #{tpu_custom_call.1} parent=31 // pred_check
          %p331 = pneg %p119
        $region34: #{tpu_custom_call.1} parent=31 // pred_check_branch
          %333 = sbr.rel (%p331) target = $region36
        $region35: #{tpu_custom_call.1} parent=31 // pred_region
          %s335 = ssub.s32 512, 512
          %336 = vsyncadd %s327, %s335
          %s337 = smul.addr %s21, 4
          %s338 = sadd.s32 %s22, %s337
          %s339 = smul.addr %s338, 128
          %s340 = scalar_lea.hbm %s3, %s339
          %s341 = sshll.u32 %s330, 4
          %s342 = int_to_ptr.vmem [resolvable:$true] %s341
          %347 = dma.vmem_to_hbm [thread:$0]  %s342, 512, %s340, %s327, 128, 128, 8
        $region36: #{tpu_custom_call.1} parent=31 // pred_fallthru
          _
      $region32: #{tpu_custom_call.1} parent=5 // pred_fallthru
        _
      %p348 = scmp.le.s32.totalorder 2, %s12
      // Predicated region
      $region37: #{tpu_custom_call.1} parent=5 // pred_check
        %p349 = pneg %p348
      $region38: #{tpu_custom_call.1} parent=5 // pred_check_branch
        %351 = sbr.rel (%p349) target = $region40
      $region39: #{tpu_custom_call.1} parent=5 // pred_region
        %s352 = ssub.s32 %s12, 2
        // Predicated region
        $region41: #{tpu_custom_call.1} parent=39 // pred_check
          %p353 = pneg %p125
        $region42: #{tpu_custom_call.1} parent=39 // pred_check_branch
          %355 = sbr.rel (%p353) target = $region44
        $region43: #{tpu_custom_call.1} parent=39 // pred_region
          %s356 = sand.u32 %s110, 1
          %s357 = scalar_lea.sflag [#allocation3], %s356
          %s358 = sand.u32 %s110, 1
          %s359 = smul.addr %s358, 32
          %s360 = scalar_lea.vmem [#allocation2], %s359
          %361 = dma.done %s357, 512
        $region44: #{tpu_custom_call.1} parent=39 // pred_fallthru
          _
      $region40: #{tpu_custom_call.1} parent=5 // pred_fallthru
        _
    $region6: #{tpu_custom_call.1} parent=1 // loop_footer
      %s16 = sadd.s32 1, %s12
    $region7: #{tpu_custom_call.1} parent=1 // loop_footer_branch
      %11 = sbr.rel target = $region3
    $region8: #{tpu_custom_call.1} parent=1 // loop_exit
      _
    %362 = vsyncpa [#allocation3], 1
    %s363 = scalar_lea.sflag [#allocation3], 1
    %364 = vsyncpa %s363, 1

</llo_original>
